<compile_context>
chip_gen: v7x
topology: tpu7x:2x2x1
jax: 0.10.0
libtpu: 0.0.40
codegen_flags: <defaults>
</compile_context>

<pallas_src>
import functools

import jax
import jax.numpy as jnp
from jax.experimental import pallas as pl
from jax.experimental.pallas import tpu as pltpu

_LANES = 512          # lane-dense last dim (multiple of 128)
_MAX_TILE_ROWS = 2048 # row tile (multiple of 16 -> bf16-safe); 4 MiB/stream f32


def _pair_sum_kernel(p_ref, t_ref, o_ref, acc_ref, *,
                     r_loss, rows, tile_rows, lanes):
    """Streaming sum of per-element MSE / BCE terms for one (pred, target) pair."""
    i = pl.program_id(0)

    @pl.when(i == 0)
    def _init():
        acc_ref[...] = jnp.zeros_like(acc_ref)

    p = p_ref[...].astype(jnp.float32)
    t = t_ref[...].astype(jnp.float32)

    if r_loss == 'MSE':
        d = p - t
        term = d * d
    else:  # 'BCE' — matches nn.BCELoss terms; clamp log BEFORE multiply.
        logp = jnp.maximum(jnp.log(p), -100.0)
        log1mp = jnp.maximum(jnp.log(1.0 - p), -100.0)
        term = -(t * logp + (1.0 - t) * log1mp)

    if rows % tile_rows != 0:
        # Partial last tile: rows beyond `rows` hold unspecified VMEM data.
        ridx = i * tile_rows + jax.lax.broadcasted_iota(jnp.int32, term.shape, 0)
        term = jnp.where(ridx < rows, term, 0.0)

    if tile_rows % 8 == 0:
        # Sublane-major fold -> (8, lanes): pure VALU vreg adds (no XLU, few vst).
        acc_ref[...] += jnp.sum(term.reshape(tile_rows // 8, 8, lanes), axis=0)
    else:
        # Tiny single-tile case (rows < 8): accumulator is (1, lanes).
        acc_ref[...] += jnp.sum(term, axis=0, keepdims=True)

    @pl.when(i == pl.num_programs(0) - 1)
    def _finalize():
        o_ref[...] = jnp.full(o_ref.shape, jnp.sum(acc_ref[...]), jnp.float32)


def _pair_term_sum_ref(pred, target, r_loss):
    """Plain-JAX sum of loss terms (used for the < 512-element tail)."""
    p = pred.astype(jnp.float32)
    t = target.astype(jnp.float32)
    if r_loss == 'MSE':
        return jnp.sum((p - t) ** 2)
    logp = jnp.maximum(jnp.log(p), -100.0)
    log1mp = jnp.maximum(jnp.log(1.0 - p), -100.0)
    return jnp.sum(-(t * logp + (1.0 - t) * log1mp))


def _pair_loss_sum(pred, target, r_loss, max_tile_rows=_MAX_TILE_ROWS):
    """SUM of per-element loss terms over a (pred, target) pair via Pallas."""
    pred = jnp.asarray(pred).reshape(-1)
    target = jnp.asarray(target).reshape(-1)
    n = int(pred.size)
    lanes = _LANES
    rows = n // lanes
    rem = n - rows * lanes

    total = jnp.float32(0.0)
    if rem > 0:
        # < 512 trailing elements: negligible, keep them out of the kernel.
        tail_p = jax.lax.slice(pred, (rows * lanes,), (n,))
        tail_t = jax.lax.slice(target, (rows * lanes,), (n,))
        total = total + _pair_term_sum_ref(tail_p, tail_t, r_loss)
    if rows == 0:
        return total

    if rem == 0:
        p2 = pred.reshape(rows, lanes)      # zero-copy reshape
        t2 = target.reshape(rows, lanes)
    else:
        # Rare unaligned case: prefix slice (may copy), tail handled above.
        p2 = jax.lax.slice(pred, (0,), (rows * lanes,)).reshape(rows, lanes)
        t2 = jax.lax.slice(target, (0,), (rows * lanes,)).reshape(rows, lanes)

    # Full-extent block when small (always layout-legal), else the big tile.
    tile_rows = rows if rows <= max_tile_rows else max_tile_rows
    num_tiles = pl.cdiv(rows, tile_rows)
    acc_rows = 8 if tile_rows % 8 == 0 else 1

    kernel = functools.partial(
        _pair_sum_kernel, r_loss=r_loss, rows=rows,
        tile_rows=tile_rows, lanes=lanes)

    flops_per_elem = 8 if r_loss == 'BCE' else 3
    cost = pl.CostEstimate(
        flops=int(flops_per_elem * rows * lanes),
        transcendentals=int(2 * rows * lanes) if r_loss == 'BCE' else 0,
        bytes_accessed=int(p2.nbytes + t2.nbytes),
    )

    out = pl.pallas_call(
        kernel,
        out_shape=jax.ShapeDtypeStruct((8, 128), jnp.float32),
        grid_spec=pltpu.PrefetchScalarGridSpec(
            num_scalar_prefetch=0,
            grid=(num_tiles,),
            in_specs=[pl.BlockSpec((tile_rows, lanes), lambda i: (i, 0)),
                      pl.BlockSpec((tile_rows, lanes), lambda i: (i, 0))],
            out_specs=pl.BlockSpec((8, 128), lambda i: (0, 0)),
            scratch_shapes=[pltpu.VMEM((acc_rows, lanes), jnp.float32)]),
        compiler_params=pltpu.CompilerParams(
            dimension_semantics=("arbitrary",),
            vmem_limit_bytes=48 * 1024 * 1024),
        cost_estimate=cost,
    )(p2, t2)

    return total + out[0, 0]


def vae_intp_loss(inpt, target, mu, logvar, intp, target_intp,
                  r_loss='MSE', beta=1.0, max_tile_rows=_MAX_TILE_ROWS):
    """JAX/Pallas equivalent of VAEIntpLoss(r_loss, beta).forward(...)."""
    if r_loss not in ('MSE', 'BCE'):
        raise ValueError('Reconstruction Loss not in [MSE, BCE]')

    inpt = jnp.asarray(inpt)
    target = jnp.asarray(target)
    intp = jnp.asarray(intp)
    target_intp = jnp.asarray(target_intp)

    n_recon = int(inpt.size)
    n_intp = int(intp.size)

    recon = _pair_loss_sum(inpt, target, r_loss, max_tile_rows) * (1.0 / n_recon)
    intp_l = _pair_loss_sum(intp, target_intp, r_loss, max_tile_rows) * (1.0 / n_intp)

    # KLD on the tiny (batch, latent) mu/logvar: plain JAX (per perf review).
    mu_f = jnp.asarray(mu).astype(jnp.float32)
    lv_f = jnp.asarray(logvar).astype(jnp.float32)
    kld = -0.5 * jnp.sum(1.0 + lv_f - mu_f * mu_f - jnp.exp(lv_f))

    return recon + beta * kld + intp_l


def _reference(inpt, target, mu, logvar, intp, target_intp, r_loss, beta):
    """Pure-JAX reference for verification."""
    if r_loss == 'MSE':
        recon = jnp.mean((inpt - target) ** 2)
        intp_l = jnp.mean((intp - target_intp) ** 2)
    else:
        def bce(p, q):
            return -jnp.mean(q * jnp.maximum(jnp.log(p), -100.0)
                             + (1 - q) * jnp.maximum(jnp.log(1 - p), -100.0))
        recon = bce(inpt, target)
        intp_l = bce(intp, target_intp)
    kld = -0.5 * jnp.sum(1.0 + logvar - mu ** 2 - jnp.exp(logvar))
    return recon + beta * kld + intp_l


if __name__ == "__main__":
    key = jax.random.PRNGKey(0)
    LATENT = 32

    # (shape, max_tile_rows): exercises single-tile, multi-tile + masked tail,
    # and the sub-512-element JAX-tail paths.
    cases = [
        ((2, 4, 16, 16), _MAX_TILE_ROWS),  # 2048 elems: rows=4, one full tile
        ((2, 4, 32, 40), 8),               # 10240 elems: rows=20, 3 tiles, mask
        ((2, 3, 11, 13), _MAX_TILE_ROWS),  # 858 elems: rows=1 + 346-elem tail
    ]

    ok = True
    for idx, (shape, mtr) in enumerate(cases):
        k1, k2, k3, k4, k5, k6 = jax.random.split(jax.random.fold_in(key, idx), 6)
        inpt = jax.random.uniform(k1, shape, jnp.float32, 1e-3, 1.0 - 1e-3)
        target = jax.random.uniform(k2, shape, jnp.float32, 1e-3, 1.0 - 1e-3)
        mu = jax.random.normal(k3, (shape[0], LATENT), jnp.float32) * 0.1
        logvar = jax.random.normal(k4, (shape[0], LATENT), jnp.float32) * 0.1
        intp = jax.random.uniform(k5, shape, jnp.float32, 1e-3, 1.0 - 1e-3)
        target_intp = jax.random.uniform(k6, shape, jnp.float32, 1e-3, 1.0 - 1e-3)

        for r_loss in ('MSE', 'BCE'):
            out = vae_intp_loss(inpt, target, mu, logvar, intp, target_intp,
                                r_loss=r_loss, beta=1.0, max_tile_rows=mtr)
            out = jax.block_until_ready(out)
            ref = _reference(inpt, target, mu, logvar, intp, target_intp,
                             r_loss, 1.0)
            if not jnp.allclose(out, ref, rtol=1e-4, atol=1e-4):
                ok = False
                print(f"MISMATCH shape={shape} {r_loss}: kernel={out} ref={ref}")

    if ok:
        print("KERNEL_OK")
    else:
        print("KERNEL_MISMATCH")
</pallas_src>

<mosaic_0001>
module attributes {stable_mosaic.version = 11 : i64} {
  func.func @_pair_sum_kernel(%arg0: i32, %arg1: memref<4x512xf32, #tpu.memory_space<vmem>>, %arg2: memref<4x512xf32, #tpu.memory_space<vmem>>, %arg3: memref<8x128xf32, #tpu.memory_space<vmem>>, %arg4: memref<1x512xf32, #tpu.memory_space<vmem>>) attributes {dimension_semantics = [#tpu.dimension_semantics<arbitrary>], iteration_bounds = array<i64: 1>, scalar_prefetch = 0 : i64, scratch_operands = 1 : i64, tpu.core_type = #tpu.core_type<tc>, window_params = [{transform_indices = @transform_0, window_bounds = array<i64: 4, 512>}, {transform_indices = @transform_1, window_bounds = array<i64: 4, 512>}, {pipeline_mode = #tpu.pipeline_mode<synchronous>, transform_indices = @transform_2, window_bounds = array<i64: 8, 128>}]} {
    %c0_i32 = arith.constant 0 : i32
    %0 = arith.cmpi eq, %arg0, %c0_i32 : i32
    %1 = arith.extui %0 : i1 to i32
    %c0_i32_0 = arith.constant 0 : i32
    %2 = arith.cmpi ne, %1, %c0_i32_0 : i32
    scf.if %2 {
      %cst_10 = arith.constant 0.000000e+00 : f32
      %15 = vector.broadcast %cst_10 : f32 to vector<1x512xf32>
      %c0_11 = arith.constant 0 : index
      %c0_12 = arith.constant 0 : index
      %16 = vector.load %arg4[%c0_11, %c0_12] : memref<1x512xf32, #tpu.memory_space<vmem>>, vector<1x512xf32>
      tpu.vector_store %arg4[%c0_11, %c0_12], %15 {strides = array<i32>} : memref<1x512xf32, #tpu.memory_space<vmem>>, vector<1x512xf32>,
    } else {
    }
    %c0 = arith.constant 0 : index
    %c0_1 = arith.constant 0 : index
    %3 = vector.load %arg1[%c0, %c0_1] : memref<4x512xf32, #tpu.memory_space<vmem>>, vector<4x512xf32>
    %c0_2 = arith.constant 0 : index
    %c0_3 = arith.constant 0 : index
    %4 = vector.load %arg2[%c0_2, %c0_3] : memref<4x512xf32, #tpu.memory_space<vmem>>, vector<4x512xf32>
    %5 = arith.subf %3, %4 : vector<4x512xf32>
    %6 = arith.mulf %5, %5 : vector<4x512xf32>
    %c0_4 = arith.constant 0 : index
    %c0_5 = arith.constant 0 : index
    %7 = vector.load %arg4[%c0_4, %c0_5] : memref<1x512xf32, #tpu.memory_space<vmem>>, vector<1x512xf32>
    %cst = arith.constant dense<0.000000e+00> : vector<512xf32>
    %8 = vector.multi_reduction <add>, %6, %cst [0] : vector<4x512xf32> to vector<512xf32>
    %9 = vector.shape_cast %8 : vector<512xf32> to vector<1x512xf32>
    %10 = arith.addf %7, %9 : vector<1x512xf32>
    %c0_6 = arith.constant 0 : index
    %c0_7 = arith.constant 0 : index
    %11 = vector.load %arg4[%c0_6, %c0_7] : memref<1x512xf32, #tpu.memory_space<vmem>>, vector<1x512xf32>
    tpu.vector_store %arg4[%c0_6, %c0_7], %10 {strides = array<i32>} : memref<1x512xf32, #tpu.memory_space<vmem>>, vector<1x512xf32>,
    %c0_i32_8 = arith.constant 0 : i32
    %12 = arith.cmpi eq, %arg0, %c0_i32_8 : i32
    %13 = arith.extui %12 : i1 to i32
    %c0_i32_9 = arith.constant 0 : i32
    %14 = arith.cmpi ne, %13, %c0_i32_9 : i32
    scf.if %14 {
      %c0_10 = arith.constant 0 : index
      %c0_11 = arith.constant 0 : index
      %15 = vector.load %arg4[%c0_10, %c0_11] : memref<1x512xf32, #tpu.memory_space<vmem>>, vector<1x512xf32>
      %16 = vector.shape_cast %15 : vector<1x512xf32> to vector<1x1x512xf32>
      %cst_12 = arith.constant dense<0.000000e+00> : vector<1xf32>
      %17 = vector.multi_reduction <add>, %16, %cst_12 [1, 2] : vector<1x1x512xf32> to vector<1xf32>
      %18 = vector.shape_cast %17 : vector<1xf32> to vector<1x1x1xf32>
      %19 = vector.extract %18[0, 0, 0] : f32 from vector<1x1x1xf32>
      %20 = vector.broadcast %19 : f32 to vector<8x128xf32>
      %c0_13 = arith.constant 0 : index
      %c0_14 = arith.constant 0 : index
      %21 = vector.load %arg3[%c0_13, %c0_14] : memref<8x128xf32, #tpu.memory_space<vmem>>, vector<8x128xf32>
      tpu.vector_store %arg3[%c0_13, %c0_14], %20 {strides = array<i32>} : memref<8x128xf32, #tpu.memory_space<vmem>>, vector<8x128xf32>,
    } else {
    }
    return
  }
  func.func @transform_0(%arg0: i32) -> (i32, i32) {
    %c0_i32 = arith.constant 0 : i32
    %c0_i32_0 = arith.constant 0 : i32
    return %arg0, %c0_i32 : i32, i32
  }
  func.func @transform_1(%arg0: i32) -> (i32, i32) {
    %c0_i32 = arith.constant 0 : i32
    %c0_i32_0 = arith.constant 0 : i32
    return %arg0, %c0_i32 : i32, i32
  }
  func.func @transform_2(%arg0: i32) -> (i32, i32) {
    %c0_i32 = arith.constant 0 : i32
    %c0_i32_0 = arith.constant 0 : i32
    %c0_i32_1 = arith.constant 0 : i32
    return %c0_i32, %c0_i32_0 : i32, i32
  }
}

</mosaic_0001>

<llo_original>
// kernel: tpu_custom_call.1
$region0: #{tpu_custom_call.1}
  #allocation0 [shape = 'u32[]', space=smem, size = 0x4, offset = 0x4, fixed_abs, tag = 'smem constant byte address 0x4 - core index']
  #allocation1 [shape = 'u32[144,128]{1,0:T(1,128)}', space=vmem, size = 0x12000, scoped, tag = 'internal scratch']
  #allocation2 [shape = 'f32[1,512]{1,0:T(1,128)}', space=vmem, size = 0x800, scoped, tag = 'scratch operand']
  %s0 = inlined_call_operand.hbm [shape: f32[4,512], index: 0, kind: input, shape index: {}]
  %s1 = inlined_call_operand.hbm [shape: f32[4,512], index: 1, kind: input, shape index: {}]
  %s2 = inlined_call_operand.hbm [shape: f32[8,128], index: 2, kind: output, shape index: {}]
  %s3 = sld [smem:[#allocation0]]
  $region34: #{tpu_custom_call.1} parent=0
    _
  %s5 = ssub.s32 1, %s3
  %s6 = scalar_select 0, %s5, %s3
  $region1: #{tpu_custom_call.1} parent=0
    #allocation3 [shape = 'u8[8192]{0}', space=vmem, size = 0x2000, scoped, tag = 'input window, operand 0, single buffered']
    #allocation4 [shape = 's32[1]{0}', space=sflag, size = 0x4, scoped, tag = 'scoped memory for tpu_custom_call.1']
    #allocation5 [shape = 's32[1]{0}', space=sflag, size = 0x4, scoped, tag = 'scoped memory for tpu_custom_call.1']
    #allocation6 [shape = 'u8[8192]{0}', space=vmem, size = 0x2000, scoped, tag = 'input window, operand 1, single buffered']
    #allocation7 [shape = 's32[1]{0}', space=sflag, size = 0x4, scoped, tag = 'scoped memory for tpu_custom_call.1']
    #allocation8 [shape = 'u8[4096]{0}', space=vmem, size = 0x1000, scoped, tag = 'output window, operand 0, single buffered']
    %7 = vsyncpa [#allocation4], 0
    %8 = vsyncpa [#allocation7], 0
    %9 = vsyncpa [#allocation5], 0
    // Predicated region
    $region2: #{tpu_custom_call.1} parent=1 // pred_check
      _
    $region3: #{tpu_custom_call.1} parent=1 // pred_check_branch
      %11 = sbr.rel (0) target = $region5
    $region4: #{tpu_custom_call.1} parent=1 // pred_region
      %s13 = ssub.s32 256, 256
      %14 = vsyncadd [#allocation4], %s13
      %s16 = sshll.u32 [#allocation3], 4
      %s17 = int_to_ptr.vmem [resolvable:$true] %s16
      %19 = dma.hbm_to_vmem [thread:$0]  %s0, 256, %s17, [#allocation4]
    $region5: #{tpu_custom_call.1} parent=1 // pred_fallthru
      _
    // Predicated region
    $region6: #{tpu_custom_call.1} parent=1 // pred_check
      _
    $region7: #{tpu_custom_call.1} parent=1 // pred_check_branch
      %21 = sbr.rel (0) target = $region9
    $region8: #{tpu_custom_call.1} parent=1 // pred_region
      %s23 = ssub.s32 256, 256
      %24 = vsyncadd [#allocation7], %s23
      %s26 = sshll.u32 [#allocation6], 4
      %s27 = int_to_ptr.vmem [resolvable:$true] %s26
      %29 = dma.hbm_to_vmem [thread:$0]  %s1, 256, %s27, [#allocation7]
    $region9: #{tpu_custom_call.1} parent=1 // pred_fallthru
      _
    // Predicated region
    $region10: #{tpu_custom_call.1} parent=1 // pred_check
      _
    $region11: #{tpu_custom_call.1} parent=1 // pred_check_branch
      %31 = sbr.rel (0) target = $region13
    $region12: #{tpu_custom_call.1} parent=1 // pred_region
      %32 = dma.done [#allocation4], 256
    $region13: #{tpu_custom_call.1} parent=1 // pred_fallthru
      _
    // Predicated region
    $region14: #{tpu_custom_call.1} parent=1 // pred_check
      _
    $region15: #{tpu_custom_call.1} parent=1 // pred_check_branch
      %34 = sbr.rel (0) target = $region17
    $region16: #{tpu_custom_call.1} parent=1 // pred_region
      %35 = dma.done [#allocation7], 256
    $region17: #{tpu_custom_call.1} parent=1 // pred_fallthru
      _
    %p36 = scmp.eq.s32.totalorder 0, 0
    // Predicated region
    $region18: #{tpu_custom_call.1} parent=1 // pred_check
      %p37 = pneg %p36
    $region19: #{tpu_custom_call.1} parent=1 // pred_check_branch
      %39 = sbr.rel (%p37) target = $region21
    $region20: #{tpu_custom_call.1} parent=1 // pred_region
      %v40 = vlaneseq
      %vm41 = vcmp.ge.s32.totalorder %v40, 0
      %vm42 = vcmp.lt.s32.totalorder %v40, 512
      %vm43 = vmand %vm41, %vm42
      %44 = vst.msk [vmem:[#allocation2] sm:$0xf] %vm43, 0.0
    $region21: #{tpu_custom_call.1} parent=1 // pred_fallthru
      _
    %v45 = vld [vmem:[#allocation3] sm:$0xff]
    %v46 = vld [vmem:[#allocation3 + $0x8] sm:$0xff]
    %v47 = vld [vmem:[#allocation6] sm:$0xff]
    %v48 = vld [vmem:[#allocation6 + $0x8] sm:$0xff]
    %v49 = vsub.f32 %v45, %v47
    %v50 = vsub.f32 %v46, %v48
    %v51 = vmul.f32 %v49, %v49
    %v52 = vmul.f32 %v50, %v50
    %v53 = vld [vmem:[#allocation2] sm:$0xf]
    %v56 = vcombine.high %v51, %v51
    %v57 = vcombine.high %v52, %v52
    %vm60 = vcmask 1043456
    %v61 = vsel %vm60, %v51, 0.0
    %v62 = vrot.slane %v61, 4
    %v63 = vadd.f32 %v61, %v62
    %v64 = vrot.slane %v63, 2
    %v65 = vadd.f32 %v63, %v64
    %v66 = vrot.slane %v65, 1
    %v67 = vadd.f32 %v65, %v66
    %v68 = vsel %vm60, %v56, 0.0
    %v69 = vrot.slane %v68, 4
    %v70 = vadd.f32 %v68, %v69
    %v71 = vrot.slane %v70, 2
    %v72 = vadd.f32 %v70, %v71
    %v73 = vrot.slane %v72, 1
    %v74 = vadd.f32 %v72, %v73
    %v75 = vsel %vm60, %v52, 0.0
    %v76 = vrot.slane %v75, 4
    %v77 = vadd.f32 %v75, %v76
    %v78 = vrot.slane %v77, 2
    %v79 = vadd.f32 %v77, %v78
    %v80 = vrot.slane %v79, 1
    %v81 = vadd.f32 %v79, %v80
    %v82 = vsel %vm60, %v57, 0.0
    %v83 = vrot.slane %v82, 4
    %v84 = vadd.f32 %v82, %v83
    %v85 = vrot.slane %v84, 2
    %v86 = vadd.f32 %v84, %v85
    %v87 = vrot.slane %v86, 1
    %v88 = vadd.f32 %v86, %v87
    %v93 = vcombine.low %v67, %v74
    %v94 = vcombine.low %v81, %v88
    %v96 = vunpack.c.l.s4 1966171168
    %v97 = vunpack.c.0.s8 %v96
    %v98 = vlaneseq
    %v99 = vshrl.u32 %v98, 7
    %v100 = vsub.s32 %v97, %v99
    %v101 = vrot.slane %v93, %v100
    %v103 = vunpack.c.l.s4 1966171168
    %v104 = vunpack.c.0.s8 %v103
    %v105 = vlaneseq
    %v106 = vshrl.u32 %v105, 7
    %v107 = vsub.s32 %v104, %v106
    %v108 = vrot.slane %v94, %v107
    %v109 = vcombine.low %v101, %v108
    %v111 = vunpack.c.l.s4 1966171168
    %v112 = vunpack.c.0.s8 %v111
    %v113 = vlaneseq
    %v114 = vshrl.u32 %v113, 7
    %v115 = vsub.s32 %v112, %v114
    %v116 = vrot.slane %v109, %v115
    %v118 = vadd.f32 %v53, %v116
    %v119 = vlaneseq
    %vm120 = vcmp.ge.s32.totalorder %v119, 0
    %vm121 = vcmp.lt.s32.totalorder %v119, 512
    %vm122 = vmand %vm120, %vm121
    %123 = vst.msk [vmem:[#allocation2] sm:$0xf] %vm122, %v118
    // Predicated region
    $region22: #{tpu_custom_call.1} parent=1 // pred_check
      %p124 = pneg %p36
    $region23: #{tpu_custom_call.1} parent=1 // pred_check_branch
      %126 = sbr.rel (%p124) target = $region25
    $region24: #{tpu_custom_call.1} parent=1 // pred_region
      %v127 = vld [vmem:[#allocation2] sm:$0xf]
      %v129 = vlaneseq
      %v130 = vshrl.u32 %v129, 7
      %v131 = vsub.s32 0, %v130
      %v132 = vrot.slane %v127, %v131
      %v133 = vlaneseq
      %v134 = vshrl.u32 %v133, 7
      %v135 = vsub.s32 1, %v134
      %v136 = vrot.slane %v127, %v135
      %v137 = vlaneseq
      %v138 = vshrl.u32 %v137, 7
      %v139 = vsub.s32 2, %v138
      %v140 = vrot.slane %v127, %v139
      %v141 = vlaneseq
      %v142 = vshrl.u32 %v141, 7
      %v143 = vsub.s32 3, %v142
      %v144 = vrot.slane %v127, %v143
      %vm149 = vcmask 1040384
      %v150 = vsel %vm149, %v132, 0.0
      %v151 = vsel %vm149, %v136, 0.0
      %v152 = vadd.f32 %v150, %v151
      %v153 = vsel %vm149, %v140, 0.0
      %v154 = vadd.f32 %v152, %v153
      %v155 = vsel %vm149, %v144, 0.0
      %v156 = vadd.f32 %v154, %v155
      %157 = vadd.xlane.f32.xlu0 %v156
      %v158 = vpop.xlane.xlu0 %157
      %v159 = vrot.slane %v158, 4
      %v160 = vadd.f32 %v158, %v159
      %v161 = vrot.slane %v160, 2
      %v162 = vadd.f32 %v160, %v161
      %v163 = vrot.slane %v162, 1
      %v164 = vadd.f32 %v162, %v163
      %s165 = vtos %v164
      %v166 = vstv %s165
      %167 = vst [vmem:[#allocation8] sm:$0xff] %v166
    $region25: #{tpu_custom_call.1} parent=1 // pred_fallthru
      _
    // Predicated region
    $region26: #{tpu_custom_call.1} parent=1 // pred_check
      _
    $region27: #{tpu_custom_call.1} parent=1 // pred_check_branch
      %169 = sbr.rel (0) target = $region29
    $region28: #{tpu_custom_call.1} parent=1 // pred_region
      %s171 = ssub.s32 128, 128
      %172 = vsyncadd [#allocation5], %s171
      %s174 = sshll.u32 [#allocation8], 4
      %s175 = int_to_ptr.vmem [resolvable:$true] %s174
      %177 = dma.vmem_to_hbm [thread:$0]  %s175, 128, %s2, [#allocation5]
    $region29: #{tpu_custom_call.1} parent=1 // pred_fallthru
      _
    // Predicated region
    $region30: #{tpu_custom_call.1} parent=1 // pred_check
      _
    $region31: #{tpu_custom_call.1} parent=1 // pred_check_branch
      %179 = sbr.rel (0) target = $region33
    $region32: #{tpu_custom_call.1} parent=1 // pred_region
      %180 = dma.done [#allocation5], 128
    $region33: #{tpu_custom_call.1} parent=1 // pred_fallthru
      _
    %181 = vsyncpa [#allocation4], 1
    %182 = vsyncpa [#allocation7], 1
    %183 = vsyncpa [#allocation5], 1

</llo_original>
